<compile_context>
chip_gen: v7x
topology: tpu7x:2x2x1
jax: 0.10.0
libtpu: 0.0.40
codegen_flags: <defaults>
</compile_context>

<pallas_src>
import jax
import jax.numpy as jnp
from jax.experimental import pallas as pl
from jax.experimental.pallas import tpu as pltpu

IN_FEATURES = 256
OUT_FEATURES = 6


def _linear_kernel(x_ref, w_ref, b_ref, o_ref):
    # x_ref: (TM, 256)  w_ref: (256, 6)  b_ref: (1, 6)  o_ref: (TM, 6)
    acc = jnp.dot(x_ref[...], w_ref[...], preferred_element_type=jnp.float32)
    o_ref[...] = (acc + b_ref[...]).astype(o_ref.dtype)


def regression_network_forward(x, w_t, b, *, tm=4096):
    """x: (B, 256), w_t: (256, 6), b: (6,) -> (B, 2, 3) in x.dtype."""
    B = x.shape[0]

    # Tile size: keep >= 2 grid steps when possible (v7x megacore), round to a
    # multiple of 8 (sublane alignment), and never below 8.
    half_rounded = (((B + 1) // 2) + 7) // 8 * 8
    TM = min(tm, half_rounded)
    TM = max(8, (TM // 8) * 8)

    grid = (pl.cdiv(B, TM),)
    b2d = b.reshape(1, OUT_FEATURES)
    bpe = jnp.dtype(x.dtype).itemsize

    cost = pl.CostEstimate(
        flops=2 * B * IN_FEATURES * OUT_FEATURES,
        transcendentals=0,
        bytes_accessed=(
            B * IN_FEATURES * bpe            # x reads (dominant term)
            + B * OUT_FEATURES * bpe         # out writes
            + IN_FEATURES * OUT_FEATURES * 4  # weight
            + OUT_FEATURES * 4                # bias
        ),
    )

    out = pl.pallas_call(
        _linear_kernel,
        out_shape=jax.ShapeDtypeStruct((B, OUT_FEATURES), x.dtype),
        grid=grid,
        in_specs=[
            pl.BlockSpec((TM, IN_FEATURES), lambda i: (i, 0)),
            pl.BlockSpec((IN_FEATURES, OUT_FEATURES), lambda i: (0, 0)),
            pl.BlockSpec((1, OUT_FEATURES), lambda i: (0, 0)),
        ],
        out_specs=pl.BlockSpec((TM, OUT_FEATURES), lambda i: (i, 0)),
        compiler_params=pltpu.CompilerParams(
            dimension_semantics=("parallel",),
        ),
        cost_estimate=cost,
    )(x, w_t, b2d)

    # view(-1, 2, 3) glue from the PyTorch module.
    return out.reshape(-1, 2, 3)


def init_params(key):
    """Deterministic init mimicking nn.Linear default: U(-1/sqrt(in), 1/sqrt(in))."""
    k_w, k_b = jax.random.split(key)
    bound = 1.0 / (IN_FEATURES ** 0.5)
    # PyTorch stores weight as (out, in); we keep its transpose (in, out).
    w = jax.random.uniform(
        k_w, (OUT_FEATURES, IN_FEATURES), jnp.float32, minval=-bound, maxval=bound
    )
    b = jax.random.uniform(
        k_b, (OUT_FEATURES,), jnp.float32, minval=-bound, maxval=bound
    )
    return w.T, b


if __name__ == "__main__":
    key = jax.random.PRNGKey(0)
    k_x, k_p, k_x2, k_x3 = jax.random.split(key, 4)
    w_t, b = init_params(k_p)

    # Case 1: small batch (single-tile path, TM clamp to 8).
    B = 8
    x = jax.random.normal(k_x, (B, IN_FEATURES), jnp.float32)
    out = jax.block_until_ready(regression_network_forward(x, w_t, b))
    ref = (x @ w_t + b[None, :]).reshape(-1, 2, 3)
    assert out.shape == (B, 2, 3), out.shape
    assert jnp.allclose(out, ref, atol=1e-5, rtol=1e-5)

    # Case 2: multi-tile grid with a ragged trailing tile (no wrapper padding).
    B2 = 200
    x2 = jax.random.normal(k_x2, (B2, IN_FEATURES), jnp.float32)
    out2 = jax.block_until_ready(regression_network_forward(x2, w_t, b, tm=64))
    ref2 = (x2 @ w_t + b[None, :]).reshape(-1, 2, 3)
    assert out2.shape == (B2, 2, 3), out2.shape
    assert jnp.allclose(out2, ref2, atol=1e-5, rtol=1e-5)

    # Case 3: batch not a multiple of 8 (partial trailing block, masked write).
    B3 = 13
    x3 = jax.random.normal(k_x3, (B3, IN_FEATURES), jnp.float32)
    out3 = jax.block_until_ready(regression_network_forward(x3, w_t, b))
    ref3 = (x3 @ w_t + b[None, :]).reshape(-1, 2, 3)
    assert out3.shape == (B3, 2, 3), out3.shape
    assert jnp.allclose(out3, ref3, atol=1e-5, rtol=1e-5)

    # Case 4: bf16 inputs from the producer (halves the dominant x read bytes
    # on v6e/v7x); f32 accumulation inside the kernel, bf16 output.
    x_bf = x2.astype(jnp.bfloat16)
    w_bf = w_t.astype(jnp.bfloat16)
    out_bf = jax.block_until_ready(regression_network_forward(x_bf, w_bf, b))
    ref_bf = (x_bf.astype(jnp.float32) @ w_bf.astype(jnp.float32)
              + b[None, :]).reshape(-1, 2, 3)
    assert out_bf.shape == (B2, 2, 3), out_bf.shape
    assert jnp.allclose(out_bf.astype(jnp.float32), ref_bf, atol=5e-2, rtol=5e-2)

    print("KERNEL_OK")
</pallas_src>

<mosaic_0001>
module attributes {stable_mosaic.version = 11 : i64} {
  func.func @_linear_kernel(%arg0: i32, %arg1: memref<8x256xf32, #tpu.memory_space<vmem>>, %arg2: memref<256x6xf32, #tpu.memory_space<vmem>>, %arg3: memref<1x6xf32, #tpu.memory_space<vmem>>, %arg4: memref<8x6xf32, #tpu.memory_space<vmem>>) attributes {dimension_semantics = [#tpu.dimension_semantics<parallel>], iteration_bounds = array<i64: 1>, scalar_prefetch = 0 : i64, scratch_operands = 0 : i64, tpu.core_type = #tpu.core_type<tc>, window_params = [{transform_indices = @transform_0, window_bounds = array<i64: 8, 256>}, {pipeline_mode = #tpu.pipeline_mode<synchronous>, transform_indices = @transform_1, window_bounds = array<i64: 256, 6>}, {pipeline_mode = #tpu.pipeline_mode<synchronous>, transform_indices = @transform_2, window_bounds = array<i64: 1, 6>}, {transform_indices = @transform_3, window_bounds = array<i64: 8, 6>}]} {
    %c0 = arith.constant 0 : index
    %c0_0 = arith.constant 0 : index
    %0 = vector.load %arg1[%c0, %c0_0] : memref<8x256xf32, #tpu.memory_space<vmem>>, vector<8x256xf32>
    %c0_1 = arith.constant 0 : index
    %c0_2 = arith.constant 0 : index
    %1 = vector.load %arg2[%c0_1, %c0_2] : memref<256x6xf32, #tpu.memory_space<vmem>>, vector<256x6xf32>
    %cst = arith.constant dense<0.000000e+00> : vector<8x6xf32>
    %2 = tpu.matmul %0, %1, %cst {dimension_numbers = #tpu.dot_dimension_numbers<[1], [0], [0], [1], [0, 0, 1, 1], [], []>} : vector<8x256xf32>, vector<256x6xf32>, vector<8x6xf32> -> vector<8x6xf32>
    %c0_3 = arith.constant 0 : index
    %c0_4 = arith.constant 0 : index
    %3 = vector.load %arg3[%c0_3, %c0_4] : memref<1x6xf32, #tpu.memory_space<vmem>>, vector<1x6xf32>
    %4 = vector.broadcast %3 : vector<1x6xf32> to vector<8x6xf32>
    %5 = arith.addf %2, %4 : vector<8x6xf32>
    %c0_5 = arith.constant 0 : index
    %c0_6 = arith.constant 0 : index
    %6 = vector.load %arg4[%c0_5, %c0_6] : memref<8x6xf32, #tpu.memory_space<vmem>>, vector<8x6xf32>
    tpu.vector_store %arg4[%c0_5, %c0_6], %5 {strides = array<i32>} : memref<8x6xf32, #tpu.memory_space<vmem>>, vector<8x6xf32>,
    return
  }
  func.func @transform_0(%arg0: i32) -> (i32, i32) {
    %c0_i32 = arith.constant 0 : i32
    %c0_i32_0 = arith.constant 0 : i32
    return %arg0, %c0_i32 : i32, i32
  }
  func.func @transform_1(%arg0: i32) -> (i32, i32) {
    %c0_i32 = arith.constant 0 : i32
    %c0_i32_0 = arith.constant 0 : i32
    %c0_i32_1 = arith.constant 0 : i32
    return %c0_i32, %c0_i32_0 : i32, i32
  }
  func.func @transform_2(%arg0: i32) -> (i32, i32) {
    %c0_i32 = arith.constant 0 : i32
    %c0_i32_0 = arith.constant 0 : i32
    %c0_i32_1 = arith.constant 0 : i32
    return %c0_i32, %c0_i32_0 : i32, i32
  }
  func.func @transform_3(%arg0: i32) -> (i32, i32) {
    %c0_i32 = arith.constant 0 : i32
    %c0_i32_0 = arith.constant 0 : i32
    return %arg0, %c0_i32 : i32, i32
  }
}

</mosaic_0001>

<llo_original>
// kernel: tpu_custom_call.1
$region0: #{tpu_custom_call.1}
  #allocation0 [shape = 'u32[]', space=smem, size = 0x4, offset = 0x4, fixed_abs, tag = 'smem constant byte address 0x4 - core index']
  #allocation1 [shape = 'u32[144,128]{1,0:T(1,128)}', space=vmem, size = 0x12000, scoped, tag = 'internal scratch']
  %s0 = inlined_call_operand.vmem [shape: f32[8,256], index: 0, kind: input, shape index: {}]
  %s1 = inlined_call_operand.vmem [shape: f32[256,6], index: 1, kind: input, shape index: {}]
  %s2 = inlined_call_operand.vmem [shape: f32[1,6], index: 2, kind: input, shape index: {}]
  %s3 = inlined_call_operand.hbm [shape: f32[8,6], index: 3, kind: output, shape index: {}]
  %s4 = sld [smem:[#allocation0]]
  $region22: #{tpu_custom_call.1} parent=0
    _
  %s6 = ssub.s32 1, %s4
  %s7 = scalar_select 0, %s6, %s4
  $region1: #{tpu_custom_call.1} parent=0
    #allocation2 [shape = 'u8[4096]{0}', space=vmem, size = 0x1000, scoped, tag = 'output window, operand 0, single buffered']
    #allocation3 [shape = 's32[1]{0}', space=sflag, size = 0x4, scoped, tag = 'scoped memory for tpu_custom_call.1']
    %8 = vsyncpa [#allocation3], 0
    // Predicated region
    $region2: #{tpu_custom_call.1} parent=1 // pred_check
      _
    $region3: #{tpu_custom_call.1} parent=1 // pred_check_branch
      %10 = sbr.rel (0) target = $region5
    $region4: #{tpu_custom_call.1} parent=1 // pred_region
      _
    $region5: #{tpu_custom_call.1} parent=1 // pred_fallthru
      _
    // Predicated region
    $region6: #{tpu_custom_call.1} parent=1 // pred_check
      _
    $region7: #{tpu_custom_call.1} parent=1 // pred_check_branch
      %12 = sbr.rel (0) target = $region9
    $region8: #{tpu_custom_call.1} parent=1 // pred_region
      _
    $region9: #{tpu_custom_call.1} parent=1 // pred_fallthru
      _
    // Predicated region
    $region10: #{tpu_custom_call.1} parent=1 // pred_check
      _
    $region11: #{tpu_custom_call.1} parent=1 // pred_check_branch
      %14 = sbr.rel (0) target = $region13
    $region12: #{tpu_custom_call.1} parent=1 // pred_region
      _
    $region13: #{tpu_custom_call.1} parent=1 // pred_fallthru
      _
    %v15 = vld [vmem:[%s0] sm:$0xff]
    %v16 = vld [vmem:[%s0 + $0x8] sm:$0xff]
    %v17 = vld [vmem:[%s1] sm:$0xff]
    %v18 = vld [vmem:[%s1 + $0x8] sm:$0xff]
    %v19 = vld [vmem:[%s1 + $0x10] sm:$0xff]
    %v20 = vld [vmem:[%s1 + $0x18] sm:$0xff]
    %v21 = vld [vmem:[%s1 + $0x20] sm:$0xff]
    %v22 = vld [vmem:[%s1 + $0x28] sm:$0xff]
    %v23 = vld [vmem:[%s1 + $0x30] sm:$0xff]
    %v24 = vld [vmem:[%s1 + $0x38] sm:$0xff]
    %v25 = vld [vmem:[%s1 + $0x40] sm:$0xff]
    %v26 = vld [vmem:[%s1 + $0x48] sm:$0xff]
    %v27 = vld [vmem:[%s1 + $0x50] sm:$0xff]
    %v28 = vld [vmem:[%s1 + $0x58] sm:$0xff]
    %v29 = vld [vmem:[%s1 + $0x60] sm:$0xff]
    %v30 = vld [vmem:[%s1 + $0x68] sm:$0xff]
    %v31 = vld [vmem:[%s1 + $0x70] sm:$0xff]
    %v32 = vld [vmem:[%s1 + $0x78] sm:$0xff]
    %v33 = vld [vmem:[%s1 + $0x80] sm:$0xff]
    %v34 = vld [vmem:[%s1 + $0x88] sm:$0xff]
    %v35 = vld [vmem:[%s1 + $0x90] sm:$0xff]
    %v36 = vld [vmem:[%s1 + $0x98] sm:$0xff]
    %v37 = vld [vmem:[%s1 + $0xa0] sm:$0xff]
    %v38 = vld [vmem:[%s1 + $0xa8] sm:$0xff]
    %v39 = vld [vmem:[%s1 + $0xb0] sm:$0xff]
    %v40 = vld [vmem:[%s1 + $0xb8] sm:$0xff]
    %v41 = vld [vmem:[%s1 + $0xc0] sm:$0xff]
    %v42 = vld [vmem:[%s1 + $0xc8] sm:$0xff]
    %v43 = vld [vmem:[%s1 + $0xd0] sm:$0xff]
    %v44 = vld [vmem:[%s1 + $0xd8] sm:$0xff]
    %v45 = vld [vmem:[%s1 + $0xe0] sm:$0xff]
    %v46 = vld [vmem:[%s1 + $0xe8] sm:$0xff]
    %v47 = vld [vmem:[%s1 + $0xf0] sm:$0xff]
    %v48 = vld [vmem:[%s1 + $0xf8] sm:$0xff]
    %v49 = vld [vmem:[%s2] sm:$0x1]
    %v51 = vlaneseq
    %v52 = vshrl.u32 %v51, 7
    %v53 = vsub.s32 0, %v52
    %v54 = vrot.slane %v49, %v53
    %56 = vmatprep.subr.mxu0 0.0
    %57 = vmatpush1.msra.mxu0 %v17
    %58 = vmatprep.subr.mxu0 0.0
    %59 = vmatpush1.msra.mxu0 %v18
    %60 = vmatprep.subr.mxu0 0.0
    %61 = vmatpush1.msra.mxu0 %v19
    %62 = vmatprep.subr.mxu0 0.0
    %63 = vmatpush1.msra.mxu0 %v20
    %64 = vmatprep.subr.mxu0 0.0
    %65 = vmatpush1.msra.mxu0 %v21
    %66 = vmatprep.subr.mxu0 0.0
    %67 = vmatpush1.msra.mxu0 %v22
    %68 = vmatprep.subr.mxu0 0.0
    %69 = vmatpush1.msra.mxu0 %v23
    %70 = vmatprep.subr.mxu0 0.0
    %71 = vmatpush1.msra.mxu0 %v24
    %72 = vmatprep.subr.mxu0 0.0
    %73 = vmatpush1.msra.mxu0 %v25
    %74 = vmatprep.subr.mxu0 0.0
    %75 = vmatpush1.msra.mxu0 %v26
    %76 = vmatprep.subr.mxu0 0.0
    %77 = vmatpush1.msra.mxu0 %v27
    %78 = vmatprep.subr.mxu0 0.0
    %79 = vmatpush1.msra.mxu0 %v28
    %80 = vmatprep.subr.mxu0 0.0
    %81 = vmatpush1.msra.mxu0 %v29
    %82 = vmatprep.subr.mxu0 0.0
    %83 = vmatpush1.msra.mxu0 %v30
    %84 = vmatprep.subr.mxu0 0.0
    %85 = vmatpush1.msra.mxu0 %v31
    %86 = vmatprep.subr.mxu0 0.0
    %87 = vmatpush1.msra.mxu0 %v32
    %88 = vmatprep.subr.mxu0 0.0
    %89 = vmatpush1.msra.mxu0 %v33
    %90 = vmatprep.subr.mxu0 0.0
    %91 = vmatpush1.msra.mxu0 %v34
    %92 = vmatprep.subr.mxu0 0.0
    %93 = vmatpush1.msra.mxu0 %v35
    %94 = vmatprep.subr.mxu0 0.0
    %95 = vmatpush1.msra.mxu0 %v36
    %96 = vmatprep.subr.mxu0 0.0
    %97 = vmatpush1.msra.mxu0 %v37
    %98 = vmatprep.subr.mxu0 0.0
    %99 = vmatpush1.msra.mxu0 %v38
    %100 = vmatprep.subr.mxu0 0.0
    %101 = vmatpush1.msra.mxu0 %v39
    %102 = vmatprep.subr.mxu0 0.0
    %103 = vmatpush1.msra.mxu0 %v40
    %104 = vmatprep.subr.mxu0 0.0
    %105 = vmatpush1.msra.mxu0 %v41
    %106 = vmatprep.subr.mxu0 0.0
    %107 = vmatpush1.msra.mxu0 %v42
    %108 = vmatprep.subr.mxu0 0.0
    %109 = vmatpush1.msra.mxu0 %v43
    %110 = vmatprep.subr.mxu0 0.0
    %111 = vmatpush1.msra.mxu0 %v44
    %112 = vmatprep.subr.mxu0 0.0
    %113 = vmatpush1.msra.mxu0 %v45
    %114 = vmatprep.subr.mxu0 0.0
    %115 = vmatpush1.msra.mxu0 %v46
    %116 = vmatprep.subr.mxu0 0.0
    %117 = vmatpush1.msra.mxu0 %v47
    %118 = vmatprep.subr.mxu0 0.0
    %119 = vmatpush1.msra.mxu0 %v48
    %120 = vmatprep.mubr.f32.mxu0 %v16
    %121 = vmatmul.mubr.f32.gmra.mrb[0].mxu0 %v15
    %v122 = vpop.f32.mrb[0].mxu0
    %v123 = vadd.f32 %v54, %v122
    %v124 = vpop.f32.mrb[0].mxu0
    %125 = vdwg.mxu0
    %vm126 = vcmask 48128
    %127 = vst.msk [vmem:[#allocation2] sm:$0xff] %vm126, %v123
    // Predicated region
    $region14: #{tpu_custom_call.1} parent=1 // pred_check
      _
    $region15: #{tpu_custom_call.1} parent=1 // pred_check_branch
      %129 = sbr.rel (0) target = $region17
    $region16: #{tpu_custom_call.1} parent=1 // pred_region
      %s131 = ssub.s32 128, 128
      %132 = vsyncadd [#allocation3], %s131
      %s134 = sshll.u32 [#allocation2], 4
      %s135 = int_to_ptr.vmem [resolvable:$true] %s134
      %137 = dma.vmem_to_hbm [thread:$0]  %s135, 128, %s3, [#allocation3]
    $region17: #{tpu_custom_call.1} parent=1 // pred_fallthru
      _
    // Predicated region
    $region18: #{tpu_custom_call.1} parent=1 // pred_check
      _
    $region19: #{tpu_custom_call.1} parent=1 // pred_check_branch
      %139 = sbr.rel (0) target = $region21
    $region20: #{tpu_custom_call.1} parent=1 // pred_region
      %140 = dma.done [#allocation3], 128
    $region21: #{tpu_custom_call.1} parent=1 // pred_fallthru
      _
    %141 = vsyncpa [#allocation3], 1

</llo_original>
